<compile_context>
chip_gen: v7x
topology: tpu7x:2x2x1
jax: 0.10.0
libtpu: 0.0.40
codegen_flags: <defaults>
</compile_context>

<pallas_src>
import numpy as np
import jax
import jax.numpy as jnp
from jax.experimental import pallas as pl
from jax.experimental.pallas import tpu as pltpu

LANE = 128
SUBLANE = 8


# ----------------------------------------------------------------------------
# Pallas kernel: fused products + 2-chain reductions + scalar epilogue.
# ----------------------------------------------------------------------------
def _hausdorff_kernel(d_ref, x_ref, o_ref):
    # x_ref: (4, rows, 128) f32 stacked slab:
    #   [0] inner_boundary, [1] phi_inner, [2] outer_boundary, [3] phi_outer
    x = x_ref[...]
    ib = x[0]
    pi = x[1]
    ob = x[2]
    po = x[3]

    hausdorff_inner = jnp.abs(ib * po)
    hausdorff_outer = jnp.abs(ob * pi)

    # Sublane-axis partial reductions (VPU-friendly), keepdims -> (1, 128).
    s_hi = jnp.sum(hausdorff_inner, axis=0, keepdims=True)
    s_ho = jnp.sum(hausdorff_outer, axis=0, keepdims=True)
    s_ib = jnp.sum(ib, axis=0, keepdims=True)
    s_ob = jnp.sum(ob, axis=0, keepdims=True)
    m_hi = jnp.max(hausdorff_inner, axis=0, keepdims=True)
    m_ho = jnp.max(hausdorff_outer, axis=0, keepdims=True)

    # Two cross-lane XLU chains instead of six full reductions.
    sum_stack = jnp.concatenate([s_hi, s_ho, s_ib, s_ob], axis=0)   # (4, 128)
    max_stack = jnp.concatenate([m_hi, m_ho], axis=0)               # (2, 128)
    sums = jnp.sum(sum_stack, axis=1, keepdims=True)                # (4, 1)
    maxs = jnp.max(max_stack, axis=1, keepdims=True)                # (2, 1)

    # Note: division is unguarded (matches the PyTorch reference); an empty
    # boundary (sum == 0) yields inf/NaN exactly as the original module does.
    inner_mean = sums[0, 0] / sums[2, 0]
    outer_mean = sums[1, 0] / sums[3, 0]
    inner_max = maxs[0, 0]
    outer_max = maxs[1, 0]

    d = d_ref[0]
    loss = (inner_mean - d) ** 2 + (outer_mean - d) ** 2

    o_ref[0] = inner_mean
    o_ref[1] = inner_max
    o_ref[2] = outer_mean
    o_ref[3] = outer_max
    o_ref[4] = loss


def _stack_slabs(arrs):
    """Stack the four operands into one lane-dense (4, rows, 128) slab.

    Zero padding is neutral here ONLY because boundary >= 0 and
    |boundary * phi| >= 0: padded zeros add 0 to every sum and cannot raise
    either max. Do not reuse this for signed quantities.
    """
    flats = [jnp.asarray(a, dtype=jnp.float32).reshape(-1) for a in arrs]
    n = flats[0].shape[0]
    pad = (-n) % (SUBLANE * LANE)
    if pad:
        flats = [jnp.pad(f, (0, pad)) for f in flats]
    rows = (n + pad) // LANE
    return jnp.stack(flats).reshape(len(arrs), rows, LANE)


def hausdorff_fused(inner_boundary, phi_inner, outer_boundary, phi_outer,
                    d_mean=2.0):
    slab = _stack_slabs((inner_boundary, phi_inner, outer_boundary, phi_outer))
    d_arr = jnp.asarray(d_mean, dtype=jnp.float32).reshape((1,))

    out = pl.pallas_call(
        _hausdorff_kernel,
        out_shape=jax.ShapeDtypeStruct((5,), jnp.float32),
        in_specs=[
            pl.BlockSpec(memory_space=pltpu.MemorySpace.SMEM),   # d_mean
            pl.BlockSpec(memory_space=pltpu.MemorySpace.VMEM),   # stacked slab
        ],
        out_specs=pl.BlockSpec(memory_space=pltpu.MemorySpace.SMEM),
    )(d_arr, slab)

    return out[0], out[1], out[2], out[3], out[4]


# ----------------------------------------------------------------------------
# Host-side (numpy) reproduction of get_dist_map — no Pallas equivalent.
# ----------------------------------------------------------------------------
def _edt_bruteforce(binary):
    """Euclidean distance transform: for each nonzero voxel, the distance to
    the nearest zero voxel; zero voxels get 0. Matches scipy semantics for
    the small volumes used here."""
    binary = np.asarray(binary) != 0
    shape = binary.shape
    grids = np.meshgrid(*[np.arange(s) for s in shape], indexing="ij")
    coords = np.stack(grids, axis=-1).reshape(-1, len(shape)).astype(np.float64)
    zero_coords = coords[~binary.reshape(-1)]
    if zero_coords.shape[0] == 0:
        return np.zeros(shape, dtype=np.float64)
    d2 = ((coords[:, None, :] - zero_coords[None, :, :]) ** 2).sum(-1)
    dist = np.sqrt(d2.min(axis=1)).reshape(shape)
    dist[~binary] = 0.0
    return dist


def _get_dist_map_np(mmap_np, label_inner, label_outer):
    # TODO(synk): scipy.ndimage.distance_transform_edt equivalent — host-side.
    level_zero_outer = np.zeros(mmap_np.shape, dtype=np.float64)
    for q in label_outer:
        level_zero_outer[mmap_np == q] = 1
    for k in label_inner:
        level_zero_outer[mmap_np == k] = 0

    boundary_out = np.zeros(mmap_np.shape, dtype=np.float32)
    tdm_out = np.zeros(mmap_np.shape, dtype=np.float32)
    for b in range(mmap_np.shape[0]):
        tdm_outer = _edt_bruteforce(level_zero_outer[b])
        boundary = _edt_bruteforce(1 - level_zero_outer[b])
        boundary[boundary != 1] = 0
        outer = tdm_outer + boundary
        level_zero_inner = np.zeros(mmap_np.shape[1:])
        level_zero_inner[outer == 0] = 1
        tsd_inner = -1.0 * _edt_bruteforce(level_zero_inner)
        tsd = tsd_inner + tdm_outer
        boundary_out[b] = boundary.astype(np.float32)
        tdm_out[b] = tsd.astype(np.float32)
    return boundary_out, tdm_out


def hausdorff_loss_forward(mmap, d_mean=2.0):
    """Full forward(): host-side distance maps + fused Pallas tail."""
    mmap_np = np.asarray(mmap)
    inner_boundary, phi_inner = _get_dist_map_np(
        mmap_np, label_inner=[3, 5, 6, 7, 8, 9], label_outer=[2, 1, 4, 0])
    outer_boundary, phi_outer = _get_dist_map_np(
        mmap_np, label_inner=[3, 5, 6, 7, 8, 9, 2], label_outer=[1, 4, 0])
    return hausdorff_fused(
        jnp.asarray(inner_boundary), jnp.asarray(phi_inner),
        jnp.asarray(outer_boundary), jnp.asarray(phi_outer), d_mean=d_mean)


# ----------------------------------------------------------------------------
# Pure-JAX reference for the fused part of forward().
# ----------------------------------------------------------------------------
def _reference(inner_boundary, phi_inner, outer_boundary, phi_outer, d_mean=2.0):
    hi = jnp.abs(inner_boundary * phi_outer)
    ho = jnp.abs(outer_boundary * phi_inner)
    inner_mean = jnp.sum(hi) / jnp.sum(inner_boundary)
    outer_mean = jnp.sum(ho) / jnp.sum(outer_boundary)
    loss = (inner_mean - d_mean) ** 2 + (outer_mean - d_mean) ** 2
    return inner_mean, jnp.max(hi), outer_mean, jnp.max(ho), loss


if __name__ == "__main__":
    key = jax.random.PRNGKey(0)

    # map is a 4D label tensor [batch, x, y, z] with labels in 0..9
    shape = (2, 4, 16, 16)
    mmap = jax.random.randint(key, shape, 0, 10, dtype=jnp.int32)
    mmap_np = np.asarray(mmap)

    # Host-side distance maps (see TODO(synk) above).
    inner_boundary_np, phi_inner_np = _get_dist_map_np(
        mmap_np, label_inner=[3, 5, 6, 7, 8, 9], label_outer=[2, 1, 4, 0])
    outer_boundary_np, phi_outer_np = _get_dist_map_np(
        mmap_np, label_inner=[3, 5, 6, 7, 8, 9, 2], label_outer=[1, 4, 0])

    inner_boundary = jnp.asarray(inner_boundary_np, dtype=jnp.float32)
    phi_inner = jnp.asarray(phi_inner_np, dtype=jnp.float32)
    outer_boundary = jnp.asarray(outer_boundary_np, dtype=jnp.float32)
    phi_outer = jnp.asarray(phi_outer_np, dtype=jnp.float32)

    outs = hausdorff_fused(inner_boundary, phi_inner, outer_boundary,
                           phi_outer, d_mean=2.0)
    outs = jax.block_until_ready(outs)

    refs = _reference(inner_boundary, phi_inner, outer_boundary, phi_outer,
                      d_mean=2.0)
    for o, r in zip(outs, refs):
        assert jnp.allclose(o, r, atol=1e-4, rtol=1e-4), (o, r)

    print("KERNEL_OK")
</pallas_src>

<mosaic_0001>
module attributes {stable_mosaic.version = 11 : i64} {
  func.func @_hausdorff_kernel(%arg0: memref<1xf32, #tpu.memory_space<smem>>, %arg1: memref<4x16x128xf32, #tpu.memory_space<vmem>>, %arg2: memref<5xf32, #tpu.memory_space<smem>>) attributes {dimension_semantics = [], scalar_prefetch = 0 : i64, scratch_operands = 0 : i64, tpu.core_type = #tpu.core_type<tc>} {
    %c0 = arith.constant 0 : index
    %c0_0 = arith.constant 0 : index
    %c0_1 = arith.constant 0 : index
    %0 = vector.load %arg1[%c0, %c0_0, %c0_1] : memref<4x16x128xf32, #tpu.memory_space<vmem>>, vector<4x16x128xf32>
    %1 = vector.extract_strided_slice %0 {offsets = [0, 0, 0], sizes = [1, 16, 128], strides = [1, 1, 1]} : vector<4x16x128xf32> to vector<1x16x128xf32>
    %2 = vector.shape_cast %1 : vector<1x16x128xf32> to vector<16x128xf32>
    %3 = vector.extract_strided_slice %0 {offsets = [1, 0, 0], sizes = [1, 16, 128], strides = [1, 1, 1]} : vector<4x16x128xf32> to vector<1x16x128xf32>
    %4 = vector.shape_cast %3 : vector<1x16x128xf32> to vector<16x128xf32>
    %5 = vector.extract_strided_slice %0 {offsets = [2, 0, 0], sizes = [1, 16, 128], strides = [1, 1, 1]} : vector<4x16x128xf32> to vector<1x16x128xf32>
    %6 = vector.shape_cast %5 : vector<1x16x128xf32> to vector<16x128xf32>
    %7 = vector.extract_strided_slice %0 {offsets = [3, 0, 0], sizes = [1, 16, 128], strides = [1, 1, 1]} : vector<4x16x128xf32> to vector<1x16x128xf32>
    %8 = vector.shape_cast %7 : vector<1x16x128xf32> to vector<16x128xf32>
    %9 = arith.mulf %2, %8 : vector<16x128xf32>
    %10 = math.absf %9 : vector<16x128xf32>
    %11 = arith.mulf %6, %4 : vector<16x128xf32>
    %12 = math.absf %11 : vector<16x128xf32>
    %cst = arith.constant dense<0.000000e+00> : vector<128xf32>
    %13 = vector.multi_reduction <add>, %10, %cst [0] : vector<16x128xf32> to vector<128xf32>
    %14 = vector.shape_cast %13 : vector<128xf32> to vector<1x128xf32>
    %cst_2 = arith.constant dense<0.000000e+00> : vector<128xf32>
    %15 = vector.multi_reduction <add>, %12, %cst_2 [0] : vector<16x128xf32> to vector<128xf32>
    %16 = vector.shape_cast %15 : vector<128xf32> to vector<1x128xf32>
    %cst_3 = arith.constant dense<0.000000e+00> : vector<128xf32>
    %17 = vector.multi_reduction <add>, %2, %cst_3 [0] : vector<16x128xf32> to vector<128xf32>
    %18 = vector.shape_cast %17 : vector<128xf32> to vector<1x128xf32>
    %cst_4 = arith.constant dense<0.000000e+00> : vector<128xf32>
    %19 = vector.multi_reduction <add>, %6, %cst_4 [0] : vector<16x128xf32> to vector<128xf32>
    %20 = vector.shape_cast %19 : vector<128xf32> to vector<1x128xf32>
    %cst_5 = arith.constant dense<0xFF800000> : vector<128xf32>
    %21 = vector.multi_reduction <maximumf>, %10, %cst_5 [0] : vector<16x128xf32> to vector<128xf32>
    %22 = vector.shape_cast %21 : vector<128xf32> to vector<1x128xf32>
    %cst_6 = arith.constant dense<0xFF800000> : vector<128xf32>
    %23 = vector.multi_reduction <maximumf>, %12, %cst_6 [0] : vector<16x128xf32> to vector<128xf32>
    %24 = vector.shape_cast %23 : vector<128xf32> to vector<1x128xf32>
    %25 = tpu.concatenate %14, %16, %18, %20 in 0 : vector<1x128xf32>, vector<1x128xf32>, vector<1x128xf32>, vector<1x128xf32> -> vector<4x128xf32>
    %26 = tpu.concatenate %22, %24 in 0 : vector<1x128xf32>, vector<1x128xf32> -> vector<2x128xf32>
    %cst_7 = arith.constant dense<0.000000e+00> : vector<4xf32>
    %27 = vector.multi_reduction <add>, %25, %cst_7 [1] : vector<4x128xf32> to vector<4xf32>
    %28 = vector.shape_cast %27 : vector<4xf32> to vector<4x1xf32>
    %cst_8 = arith.constant dense<0xFF800000> : vector<2xf32>
    %29 = vector.multi_reduction <maximumf>, %26, %cst_8 [1] : vector<2x128xf32> to vector<2xf32>
    %30 = vector.shape_cast %29 : vector<2xf32> to vector<2x1xf32>
    %31 = vector.extract_strided_slice %28 {offsets = [0, 0], sizes = [1, 1], strides = [1, 1]} : vector<4x1xf32> to vector<1x1xf32>
    %32 = vector.extract %31[0, 0] : f32 from vector<1x1xf32>
    %33 = vector.extract_strided_slice %28 {offsets = [2, 0], sizes = [1, 1], strides = [1, 1]} : vector<4x1xf32> to vector<1x1xf32>
    %34 = vector.extract %33[0, 0] : f32 from vector<1x1xf32>
    %35 = arith.divf %32, %34 : f32
    %36 = vector.extract_strided_slice %28 {offsets = [1, 0], sizes = [1, 1], strides = [1, 1]} : vector<4x1xf32> to vector<1x1xf32>
    %37 = vector.extract %36[0, 0] : f32 from vector<1x1xf32>
    %38 = vector.extract_strided_slice %28 {offsets = [3, 0], sizes = [1, 1], strides = [1, 1]} : vector<4x1xf32> to vector<1x1xf32>
    %39 = vector.extract %38[0, 0] : f32 from vector<1x1xf32>
    %40 = arith.divf %37, %39 : f32
    %41 = vector.extract_strided_slice %30 {offsets = [0, 0], sizes = [1, 1], strides = [1, 1]} : vector<2x1xf32> to vector<1x1xf32>
    %42 = vector.extract %41[0, 0] : f32 from vector<1x1xf32>
    %43 = vector.extract_strided_slice %30 {offsets = [1, 0], sizes = [1, 1], strides = [1, 1]} : vector<2x1xf32> to vector<1x1xf32>
    %44 = vector.extract %43[0, 0] : f32 from vector<1x1xf32>
    %c0_9 = arith.constant 0 : index
    %45 = memref.load %arg0[%c0_9] : memref<1xf32, #tpu.memory_space<smem>>
    %46 = arith.subf %35, %45 : f32
    %47 = arith.mulf %46, %46 : f32
    %48 = arith.subf %40, %45 : f32
    %49 = arith.mulf %48, %48 : f32
    %50 = arith.addf %47, %49 : f32
    %c0_10 = arith.constant 0 : index
    %51 = memref.load %arg2[%c0_10] : memref<5xf32, #tpu.memory_space<smem>>
    memref.store %35, %arg2[%c0_10] : memref<5xf32, #tpu.memory_space<smem>>
    %c1 = arith.constant 1 : index
    %52 = memref.load %arg2[%c1] : memref<5xf32, #tpu.memory_space<smem>>
    memref.store %42, %arg2[%c1] : memref<5xf32, #tpu.memory_space<smem>>
    %c2 = arith.constant 2 : index
    %53 = memref.load %arg2[%c2] : memref<5xf32, #tpu.memory_space<smem>>
    memref.store %40, %arg2[%c2] : memref<5xf32, #tpu.memory_space<smem>>
    %c3 = arith.constant 3 : index
    %54 = memref.load %arg2[%c3] : memref<5xf32, #tpu.memory_space<smem>>
    memref.store %44, %arg2[%c3] : memref<5xf32, #tpu.memory_space<smem>>
    %c4 = arith.constant 4 : index
    %55 = memref.load %arg2[%c4] : memref<5xf32, #tpu.memory_space<smem>>
    memref.store %50, %arg2[%c4] : memref<5xf32, #tpu.memory_space<smem>>
    return
  }
}

</mosaic_0001>

<llo_original>
// kernel: tpu_custom_call.1
$region0: #{tpu_custom_call.1}
  #allocation0 [shape = 'u32[]', space=smem, size = 0x4, offset = 0x4, fixed_abs, tag = 'smem constant byte address 0x4 - core index']
  #allocation1 [shape = 'u32[144,128]{1,0:T(1,128)}', space=vmem, size = 0x12000, scoped, tag = 'internal scratch']
  #allocation2 [shape = 'f32[1]{0:T(128)S(6)}', space=smem, size = 0x200, scoped, tag = 'scoped memory for tpu_custom_call.1']
  %s0 = inlined_call_operand.<no memory space> [shape: f32[1], index: 0, kind: input, shape index: {}]
  %s1 = inlined_call_operand.hbm [shape: f32[4,16,128], index: 1, kind: input, shape index: {}]
  %s2 = inlined_call_operand.hbm [shape: f32[5], index: 2, kind: output, shape index: {}]
  %s3 = sld [smem:[#allocation0]]
  $region22: #{tpu_custom_call.1} parent=0
    _
  %s5 = ssub.s32 1, %s3
  %s6 = scalar_select 0, %s5, %s3
  %7 = sst [smem:[#allocation2]] %s0
  $region1: #{tpu_custom_call.1} parent=0
    #allocation3 [shape = 'u8[32768]{0}', space=vmem, size = 0x8000, scoped, tag = 'input window, operand 1, single buffered']
    #allocation4 [shape = 's32[1]{0}', space=sflag, size = 0x4, scoped, tag = 'scoped memory for tpu_custom_call.1']
    #allocation5 [shape = 's32[1]{0}', space=sflag, size = 0x4, scoped, tag = 'scoped memory for tpu_custom_call.1']
    #allocation6 [shape = 'u8[512]{0}', space=smem, size = 0x200, scoped, tag = 'output window, operand 0, single buffered']
    %8 = vsyncpa [#allocation4], 0
    %9 = vsyncpa [#allocation5], 0
    // Predicated region
    $region2: #{tpu_custom_call.1} parent=1 // pred_check
      _
    $region3: #{tpu_custom_call.1} parent=1 // pred_check_branch
      %11 = sbr.rel (0) target = $region5
    $region4: #{tpu_custom_call.1} parent=1 // pred_region
      _
    $region5: #{tpu_custom_call.1} parent=1 // pred_fallthru
      _
    // Predicated region
    $region6: #{tpu_custom_call.1} parent=1 // pred_check
      _
    $region7: #{tpu_custom_call.1} parent=1 // pred_check_branch
      %13 = sbr.rel (0) target = $region9
    $region8: #{tpu_custom_call.1} parent=1 // pred_region
      %s15 = ssub.s32 1024, 1024
      %16 = vsyncadd [#allocation4], %s15
      %s17 = sshll.u32 [#allocation3], 4
      %s18 = int_to_ptr.vmem [resolvable:$true] %s17
      %23 = dma.hbm_to_vmem [thread:$0]  %s1, 1024, %s18, [#allocation4], 128, 128, 8
    $region9: #{tpu_custom_call.1} parent=1 // pred_fallthru
      _
    // Predicated region
    $region10: #{tpu_custom_call.1} parent=1 // pred_check
      _
    $region11: #{tpu_custom_call.1} parent=1 // pred_check_branch
      %25 = sbr.rel (0) target = $region13
    $region12: #{tpu_custom_call.1} parent=1 // pred_region
      %26 = dma.done [#allocation4], 1024
    $region13: #{tpu_custom_call.1} parent=1 // pred_fallthru
      _
    %v27 = vld [vmem:[#allocation3] sm:$0xff]
    %v28 = vld [vmem:[#allocation3 + $0x8] sm:$0xff]
    %v29 = vld [vmem:[#allocation3 + $0x10] sm:$0xff]
    %v30 = vld [vmem:[#allocation3 + $0x18] sm:$0xff]
    %v31 = vld [vmem:[#allocation3 + $0x20] sm:$0xff]
    %v32 = vld [vmem:[#allocation3 + $0x28] sm:$0xff]
    %v33 = vld [vmem:[#allocation3 + $0x30] sm:$0xff]
    %v34 = vld [vmem:[#allocation3 + $0x38] sm:$0xff]
    %v35 = vmul.f32 %v27, %v33
    %v36 = vmul.f32 %v28, %v34
    %v37 = vand.u32 2147483647, %v35
    %v38 = vand.u32 2147483647, %v36
    %v39 = vmul.f32 %v31, %v29
    %v40 = vmul.f32 %v32, %v30
    %v41 = vand.u32 2147483647, %v39
    %v42 = vand.u32 2147483647, %v40
    %v43 = vadd.f32 %v37, %v38
    %v44 = vrot.slane %v43, 4
    %v45 = vadd.f32 %v43, %v44
    %v46 = vrot.slane %v45, 2
    %v47 = vadd.f32 %v45, %v46
    %v48 = vrot.slane %v47, 1
    %v49 = vadd.f32 %v47, %v48
    %v50 = vadd.f32 %v41, %v42
    %v51 = vrot.slane %v50, 4
    %v52 = vadd.f32 %v50, %v51
    %v53 = vrot.slane %v52, 2
    %v54 = vadd.f32 %v52, %v53
    %v55 = vrot.slane %v54, 1
    %v56 = vadd.f32 %v54, %v55
    %v57 = vadd.f32 %v27, %v28
    %v58 = vrot.slane %v57, 4
    %v59 = vadd.f32 %v57, %v58
    %v60 = vrot.slane %v59, 2
    %v61 = vadd.f32 %v59, %v60
    %v62 = vrot.slane %v61, 1
    %v63 = vadd.f32 %v61, %v62
    %v64 = vadd.f32 %v31, %v32
    %v65 = vrot.slane %v64, 4
    %v66 = vadd.f32 %v64, %v65
    %v67 = vrot.slane %v66, 2
    %v68 = vadd.f32 %v66, %v67
    %v69 = vrot.slane %v68, 1
    %v70 = vadd.f32 %v68, %v69
    %v71 = vmax.f32 %v37, %v38
    %v72 = vrot.slane %v71, 4
    %v73 = vmax.f32 %v71, %v72
    %v74 = vrot.slane %v73, 2
    %v75 = vmax.f32 %v73, %v74
    %v76 = vrot.slane %v75, 1
    %v77 = vmax.f32 %v75, %v76
    %v78 = vmax.f32 %v41, %v42
    %v79 = vrot.slane %v78, 4
    %v80 = vmax.f32 %v78, %v79
    %v81 = vrot.slane %v80, 2
    %v82 = vmax.f32 %v80, %v81
    %v83 = vrot.slane %v82, 1
    %v84 = vmax.f32 %v82, %v83
    %vm85 = vcmask 1040384
    %v86 = vsel %vm85, %v49, %v56
    %vm87 = vcmask 1041408
    %v88 = vsel %vm87, %v86, %v63
    %vm89 = vcmask 1042432
    %v90 = vsel %vm89, %v88, %v70
    %v91 = vsel %vm85, %v77, %v84
    %vm92 = vcmask 1043456
    %v93 = vsel %vm92, %v90, 0.0
    %94 = vadd.xlane.f32.xlu0 %v93
    %v95 = vpop.xlane.xlu0 %94
    %v96 = vsel %vm87, %v91, -inf
    %97 = vmax.xlane.f32.xlu0 %v96
    %v98 = vpop.xlane.xlu0 %97
    %s99 = vtos %v95
    %v100 = vrot.slane %v95, 2
    %s101 = vtos %v100
    %v102 = vstv %s101
    %v103 = vrcp.pop %v102
    %s104 = vtos %v103
    %s105 = smul.f32 %s99, %s104
    %v106 = vrot.slane %v95, 1
    %s107 = vtos %v106
    %v108 = vrot.slane %v95, 3
    %s109 = vtos %v108
    %v110 = vstv %s109
    %v111 = vrcp.pop %v110
    %s112 = vtos %v111
    %s113 = smul.f32 %s107, %s112
    %s114 = vtos %v98
    %v115 = vrot.slane %v98, 1
    %s116 = vtos %v115
    %s117 = sld [smem:[#allocation2]]
    %s118 = ssub.f32 %s105, %s117
    %s119 = smul.f32 %s118, %s118
    %s120 = ssub.f32 %s113, %s117
    %s121 = smul.f32 %s120, %s120
    %s122 = sadd.f32 %s119, %s121
    %s123 = scalar_lea.smem [#allocation6], 0
    %124 = sst [smem:[%s123]] %s105
    %s125 = scalar_lea.smem [#allocation6], 1
    %126 = sst [smem:[%s125]] %s114
    %s127 = scalar_lea.smem [#allocation6], 2
    %128 = sst [smem:[%s127]] %s113
    %s129 = scalar_lea.smem [#allocation6], 3
    %130 = sst [smem:[%s129]] %s116
    %s131 = scalar_lea.smem [#allocation6], 4
    %132 = sst [smem:[%s131]] %s122
    // Predicated region
    $region14: #{tpu_custom_call.1} parent=1 // pred_check
      _
    $region15: #{tpu_custom_call.1} parent=1 // pred_check_branch
      %134 = sbr.rel (0) target = $region17
    $region16: #{tpu_custom_call.1} parent=1 // pred_region
      %s136 = ssub.s32 16, 16
      %137 = vsyncadd [#allocation5], %s136
      %140 = dma.smem_to_hbm [#allocation6], 16, %s2, [#allocation5]
    $region17: #{tpu_custom_call.1} parent=1 // pred_fallthru
      _
    // Predicated region
    $region18: #{tpu_custom_call.1} parent=1 // pred_check
      _
    $region19: #{tpu_custom_call.1} parent=1 // pred_check_branch
      %142 = sbr.rel (0) target = $region21
    $region20: #{tpu_custom_call.1} parent=1 // pred_region
      %143 = dma.done [#allocation5], 16
    $region21: #{tpu_custom_call.1} parent=1 // pred_fallthru
      _
    %144 = sfence
    %145 = vsyncpa [#allocation4], 1
    %146 = vsyncpa [#allocation5], 1

</llo_original>
